<compile_context>
chip_gen: v7x
topology: tpu7x:2x2x1
jax: 0.10.0
libtpu: 0.0.40
codegen_flags: <defaults>
</compile_context>

<pallas_src>
import jax
import jax.numpy as jnp
from jax.experimental import pallas as pl
from jax.experimental.pallas import tpu as pltpu


_SQRT_2_OVER_PI = 0.7978845608028654
_GELU_C = 0.044715 * _SQRT_2_OVER_PI   # pre-folded 0.044715*sqrt(2/pi)


def _gelu_tanh(x):
    # TODO(synk): HF BERT's ACT2FN["gelu"] is the erf-exact GELU; the tanh
    # approximation (max abs deviation ~3e-3) is used because tanh lowers to the EUP.
    return 0.5 * x * (1.0 + jnp.tanh(x * (_SQRT_2_OVER_PI + _GELU_C * x * x)))


def bert_intermediate_kernel(x_ref, w_ref, b_ref, o_ref):
    # x_ref : (tm, H)  activation tile in the caller's dtype (cast in-kernel)
    # w_ref : (H, I)   bf16 weight, VMEM-resident (constant index_map -> fetched once)
    # b_ref : (1, I)   f32 bias, VMEM-resident
    # o_ref : (tm, I)  output tile
    x = x_ref[...].astype(w_ref.dtype)                      # in-kernel bf16 cast
    h = jnp.dot(x, w_ref[...], preferred_element_type=jnp.float32)
    h = h + b_ref[...]                                      # f32 bias broadcast
    o_ref[...] = _gelu_tanh(h).astype(o_ref.dtype)


def _round_up(x, m):
    return (x + m - 1) // m * m


def bert_intermediate(hidden_states, w, b, *, tm=512,
                      matmul_dtype=jnp.bfloat16,
                      out_dtype=None,
                      vmem_budget_bytes=40 * 1024 * 1024,
                      vmem_limit_bytes=48 * 1024 * 1024):
    """hidden_states: [B, S, H]; w: [H, I] (transpose of torch nn.Linear weight); b: [I]."""
    B, S, H = hidden_states.shape
    Hw, I = w.shape
    assert Hw == H, "weight must be [hidden_size, intermediate_size]"
    out_dtype = hidden_states.dtype if out_dtype is None else out_dtype
    M = B * S

    in_bytes = jnp.dtype(hidden_states.dtype).itemsize
    out_bytes = jnp.dtype(out_dtype).itemsize
    w_bytes = jnp.dtype(matmul_dtype).itemsize

    # ---- row-tile selection ---------------------------------------------------
    # Full weight + bias stay resident; pick the largest tm (multiple of 8) whose
    # double-buffered activation/output tiles fit the VMEM budget.
    # TODO(synk): if I ever grows too large for a resident weight, fall back to a
    # (gn, gm) grid with the weight slab on the OUTER axis so it is fetched once.
    tm = min(_round_up(tm, 8), _round_up(M, 8))
    fixed = 2 * H * I * w_bytes + 2 * I * 4                  # resident weight + bias
    per_row = 2 * (H * in_bytes + I * out_bytes)             # streamed x + out tiles
    while tm > 8 and fixed + tm * per_row > vmem_budget_bytes:
        tm = max(_round_up(tm // 2, 8), 8)

    gm = pl.cdiv(M, tm)                                      # ragged tail -> masked writes

    x2 = hidden_states.reshape(M, H)                         # no cast / pad passes
    w_bf = w.astype(matmul_dtype)                            # one-time small cast
    b2 = b.reshape(1, I).astype(jnp.float32)                 # hoisted bias cast

    out = pl.pallas_call(
        bert_intermediate_kernel,
        out_shape=jax.ShapeDtypeStruct((M, I), out_dtype),
        grid_spec=pltpu.PrefetchScalarGridSpec(
            num_scalar_prefetch=0,
            grid=(gm,),
            in_specs=[
                pl.BlockSpec((tm, H), lambda i: (i, 0)),     # streamed activations
                pl.BlockSpec((H, I), lambda i: (0, 0)),      # resident weight
                pl.BlockSpec((1, I), lambda i: (0, 0)),      # resident bias
            ],
            out_specs=pl.BlockSpec((tm, I), lambda i: (i, 0)),
        ),
        compiler_params=pltpu.CompilerParams(
            dimension_semantics=("parallel",),               # megacore splits row tiles
            vmem_limit_bytes=vmem_limit_bytes),
    )(x2, w_bf, b2)

    return out.reshape(B, S, I)


def reference(hidden_states, w, b, matmul_dtype=jnp.bfloat16):
    # Same bf16-operand / f32-accumulate precision as the kernel.
    h = jnp.dot(hidden_states.astype(matmul_dtype), w.astype(matmul_dtype),
                preferred_element_type=jnp.float32)
    h = h + b.astype(jnp.float32)
    return _gelu_tanh(h).astype(hidden_states.dtype)


if __name__ == "__main__":
    # Small BERT-like config: batch=2, seq=8, hidden=32, intermediate=128
    B, S, H, I = 2, 8, 32, 128

    key = jax.random.PRNGKey(0)
    k1, k2, k3 = jax.random.split(key, 3)

    hidden_states = jax.random.normal(k1, (B, S, H), dtype=jnp.float32)
    # Parameters with nn.Linear(H, I) shapes, weight stored transposed as [in, out].
    w = jax.random.normal(k2, (H, I), dtype=jnp.float32) * 0.02
    b = jax.random.normal(k3, (I,), dtype=jnp.float32) * 0.02

    out = jax.block_until_ready(bert_intermediate(hidden_states, w, b))

    ref = reference(hidden_states, w, b)
    assert out.shape == (B, S, I)
    assert jnp.allclose(out, ref, atol=1e-2, rtol=1e-2), "mismatch vs reference"

    print("KERNEL_OK")
</pallas_src>

<mosaic_0001>
module attributes {stable_mosaic.version = 11 : i64} {
  func.func @bert_intermediate_kernel(%arg0: i32, %arg1: memref<16x32xf32, #tpu.memory_space<vmem>>, %arg2: memref<32x128xbf16, #tpu.memory_space<vmem>>, %arg3: memref<1x128xf32, #tpu.memory_space<vmem>>, %arg4: memref<16x128xf32, #tpu.memory_space<vmem>>) attributes {dimension_semantics = [#tpu.dimension_semantics<parallel>], iteration_bounds = array<i64: 1>, scalar_prefetch = 0 : i64, scratch_operands = 0 : i64, tpu.core_type = #tpu.core_type<tc>, window_params = [{transform_indices = @transform_0, window_bounds = array<i64: 16, 32>}, {pipeline_mode = #tpu.pipeline_mode<synchronous>, transform_indices = @transform_1, window_bounds = array<i64: 32, 128>}, {pipeline_mode = #tpu.pipeline_mode<synchronous>, transform_indices = @transform_2, window_bounds = array<i64: 1, 128>}, {transform_indices = @transform_3, window_bounds = array<i64: 16, 128>}]} {
    %c0 = arith.constant 0 : index
    %c0_0 = arith.constant 0 : index
    %0 = vector.load %arg1[%c0, %c0_0] : memref<16x32xf32, #tpu.memory_space<vmem>>, vector<16x32xf32>
    %1 = arith.truncf %0 : vector<16x32xf32> to vector<16x32xbf16>
    %c0_1 = arith.constant 0 : index
    %c0_2 = arith.constant 0 : index
    %2 = vector.load %arg2[%c0_1, %c0_2] : memref<32x128xbf16, #tpu.memory_space<vmem>>, vector<32x128xbf16>
    %cst = arith.constant dense<0.000000e+00> : vector<16x128xf32>
    %3 = tpu.matmul %1, %2, %cst {dimension_numbers = #tpu.dot_dimension_numbers<[1], [0], [0], [1], [0, 0, 1, 1], [], []>} : vector<16x32xbf16>, vector<32x128xbf16>, vector<16x128xf32> -> vector<16x128xf32>
    %c0_3 = arith.constant 0 : index
    %c0_4 = arith.constant 0 : index
    %4 = vector.load %arg3[%c0_3, %c0_4] : memref<1x128xf32, #tpu.memory_space<vmem>>, vector<1x128xf32>
    %5 = vector.broadcast %4 : vector<1x128xf32> to vector<16x128xf32>
    %6 = arith.addf %3, %5 : vector<16x128xf32>
    %cst_5 = arith.constant 5.000000e-01 : f32
    %7 = vector.broadcast %cst_5 : f32 to vector<16x128xf32>
    %8 = arith.mulf %7, %6 : vector<16x128xf32>
    %cst_6 = arith.constant 0.0356774069 : f32
    %9 = vector.broadcast %cst_6 : f32 to vector<16x128xf32>
    %10 = arith.mulf %9, %6 : vector<16x128xf32>
    %11 = arith.mulf %10, %6 : vector<16x128xf32>
    %cst_7 = arith.constant 0.797884583 : f32
    %12 = vector.broadcast %cst_7 : f32 to vector<16x128xf32>
    %13 = arith.addf %12, %11 : vector<16x128xf32>
    %14 = arith.mulf %6, %13 : vector<16x128xf32>
    %15 = math.tanh %14 : vector<16x128xf32>
    %cst_8 = arith.constant 1.000000e+00 : f32
    %16 = vector.broadcast %cst_8 : f32 to vector<16x128xf32>
    %17 = arith.addf %16, %15 : vector<16x128xf32>
    %18 = arith.mulf %8, %17 : vector<16x128xf32>
    %c0_9 = arith.constant 0 : index
    %c0_10 = arith.constant 0 : index
    %19 = vector.load %arg4[%c0_9, %c0_10] : memref<16x128xf32, #tpu.memory_space<vmem>>, vector<16x128xf32>
    tpu.vector_store %arg4[%c0_9, %c0_10], %18 {strides = array<i32>} : memref<16x128xf32, #tpu.memory_space<vmem>>, vector<16x128xf32>,
    return
  }
  func.func @transform_0(%arg0: i32) -> (i32, i32) {
    %c0_i32 = arith.constant 0 : i32
    %c0_i32_0 = arith.constant 0 : i32
    return %arg0, %c0_i32 : i32, i32
  }
  func.func @transform_1(%arg0: i32) -> (i32, i32) {
    %c0_i32 = arith.constant 0 : i32
    %c0_i32_0 = arith.constant 0 : i32
    %c0_i32_1 = arith.constant 0 : i32
    return %c0_i32, %c0_i32_0 : i32, i32
  }
  func.func @transform_2(%arg0: i32) -> (i32, i32) {
    %c0_i32 = arith.constant 0 : i32
    %c0_i32_0 = arith.constant 0 : i32
    %c0_i32_1 = arith.constant 0 : i32
    return %c0_i32, %c0_i32_0 : i32, i32
  }
  func.func @transform_3(%arg0: i32) -> (i32, i32) {
    %c0_i32 = arith.constant 0 : i32
    %c0_i32_0 = arith.constant 0 : i32
    return %arg0, %c0_i32 : i32, i32
  }
}

</mosaic_0001>

<llo_original>
// kernel: tpu_custom_call.1
$region0: #{tpu_custom_call.1}
  #allocation0 [shape = 'u32[]', space=smem, size = 0x4, offset = 0x4, fixed_abs, tag = 'smem constant byte address 0x4 - core index']
  #allocation1 [shape = 'u32[144,128]{1,0:T(1,128)}', space=vmem, size = 0x12000, scoped, tag = 'internal scratch']
  %s0 = inlined_call_operand.hbm [shape: f32[16,32], index: 0, kind: input, shape index: {}]
  %s1 = inlined_call_operand.hbm [shape: bf16[32,128], index: 1, kind: input, shape index: {}]
  %s2 = inlined_call_operand.vmem [shape: f32[1,128], index: 2, kind: input, shape index: {}]
  %s3 = inlined_call_operand.hbm [shape: f32[16,128], index: 3, kind: output, shape index: {}]
  %s4 = sld [smem:[#allocation0]]
  $region30: #{tpu_custom_call.1} parent=0
    _
  %s6 = ssub.s32 1, %s4
  %s7 = scalar_select 0, %s6, %s4
  $region1: #{tpu_custom_call.1} parent=0
    #allocation2 [shape = 'u8[8192]{0}', space=vmem, size = 0x2000, scoped, tag = 'input window, operand 0, single buffered']
    #allocation3 [shape = 's32[1]{0}', space=sflag, size = 0x4, scoped, tag = 'scoped memory for tpu_custom_call.1']
    #allocation4 [shape = 's32[1]{0}', space=sflag, size = 0x4, scoped, tag = 'scoped memory for tpu_custom_call.1']
    #allocation5 [shape = 'u8[8192]{0}', space=vmem, size = 0x2000, scoped, tag = 'input window, operand 1, single buffered']
    #allocation6 [shape = 's32[1]{0}', space=sflag, size = 0x4, scoped, tag = 'scoped memory for tpu_custom_call.1']
    #allocation7 [shape = 'u8[8192]{0}', space=vmem, size = 0x2000, scoped, tag = 'output window, operand 0, single buffered']
    %8 = vsyncpa [#allocation3], 0
    %9 = vsyncpa [#allocation6], 0
    %10 = vsyncpa [#allocation4], 0
    // Predicated region
    $region2: #{tpu_custom_call.1} parent=1 // pred_check
      _
    $region3: #{tpu_custom_call.1} parent=1 // pred_check_branch
      %12 = sbr.rel (0) target = $region5
    $region4: #{tpu_custom_call.1} parent=1 // pred_region
      %s14 = ssub.s32 256, 256
      %15 = vsyncadd [#allocation3], %s14
      %s16 = sshll.u32 [#allocation2], 4
      %s17 = int_to_ptr.vmem [resolvable:$true] %s16
      %22 = dma.hbm_to_vmem [thread:$0]  %s0, 256, %s17, [#allocation3], 128, 128, 8
    $region5: #{tpu_custom_call.1} parent=1 // pred_fallthru
      _
    // Predicated region
    $region6: #{tpu_custom_call.1} parent=1 // pred_check
      _
    $region7: #{tpu_custom_call.1} parent=1 // pred_check_branch
      %24 = sbr.rel (0) target = $region9
    $region8: #{tpu_custom_call.1} parent=1 // pred_region
      %s26 = ssub.s32 256, 256
      %27 = vsyncadd [#allocation6], %s26
      %s28 = sshll.u32 [#allocation5], 4
      %s29 = int_to_ptr.vmem [resolvable:$true] %s28
      %34 = dma.hbm_to_vmem [thread:$0]  %s1, 256, %s29, [#allocation6], 64, 64, 4
    $region9: #{tpu_custom_call.1} parent=1 // pred_fallthru
      _
    // Predicated region
    $region10: #{tpu_custom_call.1} parent=1 // pred_check
      _
    $region11: #{tpu_custom_call.1} parent=1 // pred_check_branch
      %36 = sbr.rel (0) target = $region13
    $region12: #{tpu_custom_call.1} parent=1 // pred_region
      _
    $region13: #{tpu_custom_call.1} parent=1 // pred_fallthru
      _
    // Predicated region
    $region14: #{tpu_custom_call.1} parent=1 // pred_check
      _
    $region15: #{tpu_custom_call.1} parent=1 // pred_check_branch
      %38 = sbr.rel (0) target = $region17
    $region16: #{tpu_custom_call.1} parent=1 // pred_region
      %39 = dma.done [#allocation3], 256
    $region17: #{tpu_custom_call.1} parent=1 // pred_fallthru
      _
    // Predicated region
    $region18: #{tpu_custom_call.1} parent=1 // pred_check
      _
    $region19: #{tpu_custom_call.1} parent=1 // pred_check_branch
      %41 = sbr.rel (0) target = $region21
    $region20: #{tpu_custom_call.1} parent=1 // pred_region
      %42 = dma.done [#allocation6], 256
    $region21: #{tpu_custom_call.1} parent=1 // pred_fallthru
      _
    %v44 = vld [vmem:[#allocation2] sm:$0xff]
    %v45 = vld [vmem:[#allocation2 + $0x8] sm:$0xff]
    %v46 = vpack.c.bf16 %v45, %v44
    %v47 = vld [vmem:[#allocation5] sm:$0xf]
    %v48 = vld [vmem:[#allocation5 + $0x4] sm:$0xf]
    %v49 = vld [vmem:[#allocation5 + $0x8] sm:$0xf]
    %v50 = vld [vmem:[#allocation5 + $0xc] sm:$0xf]
    %v51 = vld [vmem:[%s2] sm:$0x1]
    %v53 = vlaneseq
    %v54 = vshrl.u32 %v53, 7
    %v55 = vsub.s32 0, %v54
    %v56 = vrot.slane %v51, %v55
    %v62 = vunpack.c.l.b16 %v47
    %v63 = vunpack.c.l.b16 %v48
    %v64 = vunpack.c.l.b16 %v49
    %v65 = vunpack.c.l.b16 %v50
    %v66 = vpack.c.b16 %v63, %v62
    %v67 = vpack.c.b16 %v65, %v64
    %vm70 = vcmask 261120
    %v72 = vsel %vm70, %v46, 0
    %74 = vmatprep.subr.bf16.mxu0 0
    %75 = vmatpush1.bf16.msra.mxu0 %v66
    %76 = vmatprep.subr.bf16.mxu0 0
    %77 = vmatpush1.bf16.msra.mxu0 %v67
    %78 = vmatprep.subr.bf16.mxu0 0
    %79 = vmatpush1.bf16.msra.mxu0 0
    %80 = vmatprep.subr.bf16.mxu0 0
    %81 = vmatpush1.bf16.msra.mxu0 0
    %82 = vmatprep.subr.bf16.mxu0 0
    %83 = vmatpush1.bf16.msra.mxu0 0
    %84 = vmatprep.subr.bf16.mxu0 0
    %85 = vmatpush1.bf16.msra.mxu0 0
    %86 = vmatprep.subr.bf16.mxu0 0
    %87 = vmatpush1.bf16.msra.mxu0 0
    %88 = vmatprep.subr.bf16.mxu0 0
    %89 = vmatpush1.bf16.msra.mxu0 0
    %90 = vmatprep.subr.bf16.mxu0 0
    %91 = vmatpush1.bf16.msra.mxu0 0
    %92 = vmatprep.subr.bf16.mxu0 0
    %93 = vmatpush1.bf16.msra.mxu0 0
    %94 = vmatprep.subr.bf16.mxu0 0
    %95 = vmatpush1.bf16.msra.mxu0 0
    %96 = vmatprep.subr.bf16.mxu0 0
    %97 = vmatpush1.bf16.msra.mxu0 0
    %98 = vmatprep.subr.bf16.mxu0 0
    %99 = vmatpush1.bf16.msra.mxu0 0
    %100 = vmatprep.subr.bf16.mxu0 0
    %101 = vmatpush1.bf16.msra.mxu0 0
    %102 = vmatprep.subr.bf16.mxu0 0
    %103 = vmatpush1.bf16.msra.mxu0 0
    %104 = vmatprep.subr.bf16.mxu0 0
    %105 = vmatpush1.bf16.msra.mxu0 0
    %106 = vmatprep.mubr.bf16.mxu0 0
    %107 = vmatmul.mubr.bf16.gmra.mrb[0].mxu0 %v72
    %v108 = vpop.f32.mrb[0].mxu0
    %v109 = vadd.f32 %v56, %v108
    %v110 = vpop.f32.mrb[0].mxu0
    %v111 = vpop.f32.mrb[0].mxu0
    %v112 = vadd.f32 %v56, %v111
    %v113 = vpop.f32.mrb[0].mxu0
    %114 = vdwg.mxu0
    %v115 = vmul.f32 %v109, 0.5
    %v116 = vmul.f32 %v112, 0.5
    %v117 = vmul.f32 %v109, 0.035677407
    %v118 = vmul.f32 %v112, 0.035677407
    %v119 = vmul.f32 %v117, %v109
    %v120 = vmul.f32 %v118, %v112
    %v121 = vadd.f32 %v119, 0.7978846
    %v122 = vadd.f32 %v120, 0.7978846
    %v123 = vmul.f32 %v109, %v121
    %v124 = vmul.f32 %v112, %v122
    %v125 = vtanh.pop %v123
    %v126 = vtanh.pop %v124
    %v127 = vadd.f32 %v125, 1.0
    %v128 = vadd.f32 %v126, 1.0
    %v129 = vmul.f32 %v115, %v127
    %v130 = vmul.f32 %v116, %v128
    %131 = vst [vmem:[#allocation7] sm:$0xff] %v129
    %132 = vst [vmem:[#allocation7 + $0x8] sm:$0xff] %v130
    // Predicated region
    $region22: #{tpu_custom_call.1} parent=1 // pred_check
      _
    $region23: #{tpu_custom_call.1} parent=1 // pred_check_branch
      %134 = sbr.rel (0) target = $region25
    $region24: #{tpu_custom_call.1} parent=1 // pred_region
      %s136 = ssub.s32 256, 256
      %137 = vsyncadd [#allocation4], %s136
      %s138 = sshll.u32 [#allocation7], 4
      %s139 = int_to_ptr.vmem [resolvable:$true] %s138
      %144 = dma.vmem_to_hbm [thread:$0]  %s139, 256, %s3, [#allocation4], 128, 128, 8
    $region25: #{tpu_custom_call.1} parent=1 // pred_fallthru
      _
    // Predicated region
    $region26: #{tpu_custom_call.1} parent=1 // pred_check
      _
    $region27: #{tpu_custom_call.1} parent=1 // pred_check_branch
      %146 = sbr.rel (0) target = $region29
    $region28: #{tpu_custom_call.1} parent=1 // pred_region
      %147 = dma.done [#allocation4], 256
    $region29: #{tpu_custom_call.1} parent=1 // pred_fallthru
      _
    %148 = vsyncpa [#allocation3], 1
    %149 = vsyncpa [#allocation6], 1
    %150 = vsyncpa [#allocation4], 1

</llo_original>
